<compile_context>
chip_gen: v5e
topology: v5e:2x2
jax: 0.10.0
libtpu: 0.0.40
codegen_flags: <defaults>
</compile_context>

<pallas_src>
import jax
import jax.numpy as jnp
from jax.experimental import pallas as pl
from jax.experimental.pallas import tpu as pltpu


_TB_MAX = 2048      # max batch rows per grid step (sweepable)
_TB_QUANTUM = 256   # keeps sublane (8) and lane (128) alignment


def _pick_tile(batch):
    """Pick the batch tile: as large as possible (overhead amortization) but
    no larger than ceil(B/2) rounded up to the quantum, so that mid/large
    batches always give >= 2 grid blocks (v7x: both TensorCores work)."""
    half = -(-batch // 2)
    tb = -(-half // _TB_QUANTUM) * _TB_QUANTUM
    return int(max(_TB_QUANTUM, min(_TB_MAX, tb)))


def _cold_latent_kernel(z_ref,
                        wg1_ref, bg1_ref, wg2_ref, bg2_ref,
                        wd1_ref, bd1_ref, wd2r_ref, bd2_ref,
                        out_ref):
    # ---- generator ----
    z = z_ref[...]                                                # (TB, latent) f32
    h = jnp.dot(z.astype(jnp.bfloat16), wg1_ref[...],
                preferred_element_type=jnp.float32) + bg1_ref[...]
    h = jnp.tanh(h.astype(jnp.bfloat16))                          # bf16 EUP (v6e/v7x)
    x = jnp.dot(h, wg2_ref[...],
                preferred_element_type=jnp.float32) + bg2_ref[...]
    x = jnp.tanh(x.astype(jnp.bfloat16))                          # generator output
    # ---- discriminator ----
    d = jnp.dot(x, wd1_ref[...],
                preferred_element_type=jnp.float32) + bd1_ref[...]
    d = d.astype(jnp.bfloat16)
    d = jnp.where(d > 0, d, 0.2 * d)                              # LeakyReLU(0.2)
    # final (dh -> 1) projection as an M=1 MXU push -> lane-dense (1, TB) row
    logit = jnp.einsum('ok,bk->ob', wd2r_ref[...], d,
                       preferred_element_type=jnp.float32) + bd2_ref[0, 0]
    sig = 1.0 / (1.0 + jnp.exp(-logit))                           # exact sigmoid
    out_ref[...] = sig.reshape(out_ref.shape).astype(out_ref.dtype)


def prepare_params(params, *, lane=128):
    """One-time preprocessing (hoisted out of the per-call path):
    bf16 weight casts, wd2 row layout, bd2 SMEM scalar, and zero-padding of the
    hidden widths (gh, dh) up to the 128-lane width. The zero padding is an
    exact no-op: padded pre-activations are 0, tanh(0)=LeakyReLU(0)=0, and the
    corresponding rows of the next weight matrix are zero."""
    (wg1, bg1, wg2, bg2, wd1, bd1, wd2, bd2) = params

    def pad_cols(w, b, to):
        p = (-w.shape[1]) % to
        if p:
            w = jnp.pad(w, ((0, 0), (0, p)))
            b = jnp.pad(b, ((0, 0), (0, p)))
        return w, b

    def pad_rows(w, rows):
        p = rows - w.shape[0]
        if p:
            w = jnp.pad(w, ((0, p), (0, 0)))
        return w

    wg1, bg1 = pad_cols(wg1, bg1, lane)           # gh  -> multiple of 128
    wg2 = pad_rows(wg2, wg1.shape[1])
    wd1, bd1 = pad_cols(wd1, bd1, lane)           # dh  -> multiple of 128
    wd2 = pad_rows(wd2, wd1.shape[1])

    wg1b = wg1.astype(jnp.bfloat16)
    wg2b = wg2.astype(jnp.bfloat16)
    wd1b = wd1.astype(jnp.bfloat16)
    wd2_row = wd2.reshape(1, -1).astype(jnp.bfloat16)   # (1, dh_pad)
    bd2_s = bd2.reshape(1, 1).astype(jnp.float32)        # SMEM scalar
    return (wg1b, bg1.astype(jnp.float32), wg2b, bg2.astype(jnp.float32),
            wd1b, bd1.astype(jnp.float32), wd2_row, bd2_s)


def cold_latent_potential(z, kparams, *, tb=None):
    """Fused generator->discriminator forward. z: (B, latent) f32 -> (B, 1) f32.
    `kparams` must come from prepare_params (bf16, padded, cached once)."""
    (wg1b, bg1, wg2b, bg2, wd1b, bd1, wd2_row, bd2_s) = kparams
    B, latent = z.shape
    gh = wg1b.shape[1]
    data_dim = wg2b.shape[1]
    dh = wd1b.shape[1]

    if tb is None:
        tb = _pick_tile(B)
    tb = int(-(-tb // 8) * 8)                     # sublane alignment
    n_blocks = pl.cdiv(B, tb)
    n_rows = n_blocks * tb

    # Weights/biases: full-array blocks with a constant index_map -> VMEM-resident
    # (fetched once, reused every grid step).
    resident = lambda a: pl.BlockSpec(a.shape, lambda i: (0,) * a.ndim)

    flops = 2 * n_rows * (latent * gh + gh * data_dim + data_dim * dh + dh)
    transcendentals = n_rows * (gh + data_dim + 1)
    bytes_accessed = (4 * B * latent + 4 * n_rows
                      + 2 * (wg1b.size + wg2b.size + wd1b.size + wd2_row.size)
                      + 4 * (bg1.size + bg2.size + bd1.size + 1))

    out = pl.pallas_call(
        _cold_latent_kernel,
        out_shape=jax.ShapeDtypeStruct((n_blocks, 1, tb), jnp.float32),
        grid=(n_blocks,),
        in_specs=[
            pl.BlockSpec((tb, latent), lambda i: (i, 0)),        # z tile (pipelined)
            resident(wg1b), resident(bg1),
            resident(wg2b), resident(bg2),
            resident(wd1b), resident(bd1),
            resident(wd2_row),
            pl.BlockSpec(memory_space=pltpu.MemorySpace.SMEM),   # bd2 scalar
        ],
        out_specs=pl.BlockSpec((1, 1, tb), lambda i: (i, 0, 0)), # lane-dense row
        compiler_params=pltpu.CompilerParams(
            dimension_semantics=("parallel",)),
        cost_estimate=pl.CostEstimate(flops=flops,
                                      transcendentals=transcendentals,
                                      bytes_accessed=bytes_accessed),
    )(z, wg1b, bg1, wg2b, bg2, wd1b, bd1, wd2_row, bd2_s)

    return out.reshape(n_rows, 1)[:B]


def init_params(key, latent=32, g_hidden=64, data_dim=128, d_hidden=64, out_dim=1):
    """Deterministic synthetic parameters (Glorot-ish scaling), f32."""
    ks = jax.random.split(key, 4)

    def lin(k, fan_in, fan_out):
        scale = 1.0 / jnp.sqrt(jnp.float32(fan_in))
        w = jax.random.uniform(k, (fan_in, fan_out), jnp.float32, -scale, scale)
        b = jnp.zeros((1, fan_out), jnp.float32)
        return w, b

    wg1, bg1 = lin(ks[0], latent, g_hidden)
    wg2, bg2 = lin(ks[1], g_hidden, data_dim)
    wd1, bd1 = lin(ks[2], data_dim, d_hidden)
    wd2, bd2 = lin(ks[3], d_hidden, out_dim)
    return (wg1, bg1, wg2, bg2, wd1, bd1, wd2, bd2)


def reference_f32(z, params):
    (wg1, bg1, wg2, bg2, wd1, bd1, wd2, bd2) = params
    h = jnp.tanh(z @ wg1 + bg1)
    x = jnp.tanh(h @ wg2 + bg2)
    d = x @ wd1 + bd1
    d = jnp.where(d > 0, d, 0.2 * d)
    return jax.nn.sigmoid(d @ wd2 + bd2)


def reference_matched(z, params):
    """Mirrors the kernel's numerics: bf16 MXU inputs, bf16 activations,
    f32 accumulation, exact sigmoid."""
    (wg1, bg1, wg2, bg2, wd1, bd1, wd2, bd2) = params
    mm = lambda a, w: jnp.dot(a.astype(jnp.bfloat16), w.astype(jnp.bfloat16),
                              preferred_element_type=jnp.float32)
    h = jnp.tanh((mm(z, wg1) + bg1).astype(jnp.bfloat16))
    x = jnp.tanh((mm(h, wg2) + bg2).astype(jnp.bfloat16))
    d = (mm(x, wd1) + bd1).astype(jnp.bfloat16)
    d = jnp.where(d > 0, d, 0.2 * d)
    logit = mm(d, wd2) + bd2
    return 1.0 / (1.0 + jnp.exp(-logit))


if __name__ == "__main__":
    key = jax.random.PRNGKey(0)
    k_z, k_z2, k_p = jax.random.split(key, 3)

    B, LATENT = 8, 32
    z = jax.random.normal(k_z, (B, LATENT), jnp.float32)
    params = init_params(k_p, latent=LATENT, g_hidden=64, data_dim=128,
                         d_hidden=64, out_dim=1)
    kparams = prepare_params(params)          # one-time bf16 / padding prep

    out = jax.block_until_ready(cold_latent_potential(z, kparams))
    assert out.shape == (B, 1)
    ref_m = reference_matched(z, params)
    ref_f = reference_f32(z, params)
    assert jnp.allclose(out, ref_m, atol=2e-2), "mismatch vs. bf16-matched reference"
    assert jnp.allclose(out, ref_f, atol=5e-2), "mismatch vs. f32 reference"
    assert bool(jnp.all(jnp.isfinite(out))), "non-finite values in stored rows"

    # Exercise multi-block grid + ragged last block (no wrapper-side padding).
    B2 = 260
    z2 = jax.random.normal(k_z2, (B2, LATENT), jnp.float32)
    out2 = jax.block_until_ready(cold_latent_potential(z2, kparams))
    assert out2.shape == (B2, 1)
    assert jnp.allclose(out2, reference_matched(z2, params), atol=2e-2)
    assert bool(jnp.all(jnp.isfinite(out2)))

    print("KERNEL_OK")
</pallas_src>

<mosaic_0001>
module attributes {stable_mosaic.version = 11 : i64} {
  func.func @_cold_latent_kernel(%arg0: i32, %arg1: memref<256x32xf32, #tpu.memory_space<vmem>>, %arg2: memref<32x128xbf16, #tpu.memory_space<vmem>>, %arg3: memref<1x128xf32, #tpu.memory_space<vmem>>, %arg4: memref<128x128xbf16, #tpu.memory_space<vmem>>, %arg5: memref<1x128xf32, #tpu.memory_space<vmem>>, %arg6: memref<128x128xbf16, #tpu.memory_space<vmem>>, %arg7: memref<1x128xf32, #tpu.memory_space<vmem>>, %arg8: memref<1x128xbf16, #tpu.memory_space<vmem>>, %arg9: memref<1x1xf32, #tpu.memory_space<smem>>, %arg10: memref<1x1x256xf32, #tpu.memory_space<vmem>>) attributes {dimension_semantics = [#tpu.dimension_semantics<parallel>], iteration_bounds = array<i64: 1>, scalar_prefetch = 0 : i64, scratch_operands = 0 : i64, tpu.core_type = #tpu.core_type<tc>, window_params = [{transform_indices = @transform_0, window_bounds = array<i64: 256, 32>}, {pipeline_mode = #tpu.pipeline_mode<synchronous>, transform_indices = @transform_1, window_bounds = array<i64: 32, 128>}, {pipeline_mode = #tpu.pipeline_mode<synchronous>, transform_indices = @transform_2, window_bounds = array<i64: 1, 128>}, {pipeline_mode = #tpu.pipeline_mode<synchronous>, transform_indices = @transform_3, window_bounds = array<i64: 128, 128>}, {pipeline_mode = #tpu.pipeline_mode<synchronous>, transform_indices = @transform_4, window_bounds = array<i64: 1, 128>}, {pipeline_mode = #tpu.pipeline_mode<synchronous>, transform_indices = @transform_5, window_bounds = array<i64: 128, 128>}, {pipeline_mode = #tpu.pipeline_mode<synchronous>, transform_indices = @transform_6, window_bounds = array<i64: 1, 128>}, {pipeline_mode = #tpu.pipeline_mode<synchronous>, transform_indices = @transform_7, window_bounds = array<i64: 1, 128>}, {transform_indices = @transform_8, window_bounds = array<i64: 1, 1>}, {transform_indices = @transform_9, window_bounds = array<i64: 1, 1, 256>}]} {
    %c0 = arith.constant 0 : index
    %c0_0 = arith.constant 0 : index
    %0 = vector.load %arg1[%c0, %c0_0] : memref<256x32xf32, #tpu.memory_space<vmem>>, vector<256x32xf32>
    %1 = arith.truncf %0 : vector<256x32xf32> to vector<256x32xbf16>
    %c0_1 = arith.constant 0 : index
    %c0_2 = arith.constant 0 : index
    %2 = vector.load %arg2[%c0_1, %c0_2] : memref<32x128xbf16, #tpu.memory_space<vmem>>, vector<32x128xbf16>
    %cst = arith.constant dense<0.000000e+00> : vector<256x128xf32>
    %3 = tpu.matmul %1, %2, %cst {dimension_numbers = #tpu.dot_dimension_numbers<[1], [0], [0], [1], [0, 0, 1, 1], [], []>} : vector<256x32xbf16>, vector<32x128xbf16>, vector<256x128xf32> -> vector<256x128xf32>
    %c0_3 = arith.constant 0 : index
    %c0_4 = arith.constant 0 : index
    %4 = vector.load %arg3[%c0_3, %c0_4] : memref<1x128xf32, #tpu.memory_space<vmem>>, vector<1x128xf32>
    %5 = vector.broadcast %4 : vector<1x128xf32> to vector<256x128xf32>
    %6 = arith.addf %3, %5 : vector<256x128xf32>
    %7 = arith.truncf %6 : vector<256x128xf32> to vector<256x128xbf16>
    %8 = math.tanh %7 : vector<256x128xbf16>
    %c0_5 = arith.constant 0 : index
    %c0_6 = arith.constant 0 : index
    %9 = vector.load %arg4[%c0_5, %c0_6] : memref<128x128xbf16, #tpu.memory_space<vmem>>, vector<128x128xbf16>
    %cst_7 = arith.constant dense<0.000000e+00> : vector<256x128xf32>
    %10 = tpu.matmul %8, %9, %cst_7 {dimension_numbers = #tpu.dot_dimension_numbers<[1], [0], [0], [1], [0, 0, 1, 1], [], []>} : vector<256x128xbf16>, vector<128x128xbf16>, vector<256x128xf32> -> vector<256x128xf32>
    %c0_8 = arith.constant 0 : index
    %c0_9 = arith.constant 0 : index
    %11 = vector.load %arg5[%c0_8, %c0_9] : memref<1x128xf32, #tpu.memory_space<vmem>>, vector<1x128xf32>
    %12 = vector.broadcast %11 : vector<1x128xf32> to vector<256x128xf32>
    %13 = arith.addf %10, %12 : vector<256x128xf32>
    %14 = arith.truncf %13 : vector<256x128xf32> to vector<256x128xbf16>
    %15 = math.tanh %14 : vector<256x128xbf16>
    %c0_10 = arith.constant 0 : index
    %c0_11 = arith.constant 0 : index
    %16 = vector.load %arg6[%c0_10, %c0_11] : memref<128x128xbf16, #tpu.memory_space<vmem>>, vector<128x128xbf16>
    %cst_12 = arith.constant dense<0.000000e+00> : vector<256x128xf32>
    %17 = tpu.matmul %15, %16, %cst_12 {dimension_numbers = #tpu.dot_dimension_numbers<[1], [0], [0], [1], [0, 0, 1, 1], [], []>} : vector<256x128xbf16>, vector<128x128xbf16>, vector<256x128xf32> -> vector<256x128xf32>
    %c0_13 = arith.constant 0 : index
    %c0_14 = arith.constant 0 : index
    %18 = vector.load %arg7[%c0_13, %c0_14] : memref<1x128xf32, #tpu.memory_space<vmem>>, vector<1x128xf32>
    %19 = vector.broadcast %18 : vector<1x128xf32> to vector<256x128xf32>
    %20 = arith.addf %17, %19 : vector<256x128xf32>
    %21 = arith.truncf %20 : vector<256x128xf32> to vector<256x128xbf16>
    %cst_15 = arith.constant 0.000000e+00 : bf16
    %22 = vector.broadcast %cst_15 : bf16 to vector<256x128xbf16>
    %23 = arith.cmpf ogt, %21, %22 : vector<256x128xbf16>
    %cst_16 = arith.constant 2.001950e-01 : bf16
    %24 = vector.broadcast %cst_16 : bf16 to vector<256x128xbf16>
    %25 = arith.mulf %24, %21 : vector<256x128xbf16>
    %26 = arith.select %23, %21, %25 : vector<256x128xi1>, vector<256x128xbf16>
    %c0_17 = arith.constant 0 : index
    %c0_18 = arith.constant 0 : index
    %27 = vector.load %arg8[%c0_17, %c0_18] : memref<1x128xbf16, #tpu.memory_space<vmem>>, vector<1x128xbf16>
    "tpu.trace_start"() <{level = 10 : i32, message = "ok,bk->ob"}> : () -> ()
    %cst_19 = arith.constant dense<0.000000e+00> : vector<1x256xf32>
    %28 = tpu.matmul %27, %26, %cst_19 {dimension_numbers = #tpu.dot_dimension_numbers<[1], [1], [0], [0], [0, 0, 1, 0], [], []>} : vector<1x128xbf16>, vector<256x128xbf16>, vector<1x256xf32> -> vector<1x256xf32>
    "tpu.trace_stop"() : () -> ()
    %c0_20 = arith.constant 0 : index
    %c0_21 = arith.constant 0 : index
    %29 = memref.load %arg9[%c0_20, %c0_21] : memref<1x1xf32, #tpu.memory_space<smem>>
    %30 = vector.broadcast %29 : f32 to vector<1x256xf32>
    %31 = arith.addf %28, %30 : vector<1x256xf32>
    %cst_22 = arith.constant 0.000000e+00 : f32
    %32 = vector.broadcast %cst_22 : f32 to vector<1x256xf32>
    %33 = arith.subf %32, %31 : vector<1x256xf32>
    %34 = math.exp %33 : vector<1x256xf32>
    %cst_23 = arith.constant 1.000000e+00 : f32
    %35 = vector.broadcast %cst_23 : f32 to vector<1x256xf32>
    %36 = arith.addf %35, %34 : vector<1x256xf32>
    %cst_24 = arith.constant 1.000000e+00 : f32
    %37 = vector.broadcast %cst_24 : f32 to vector<1x256xf32>
    %38 = arith.divf %37, %36 : vector<1x256xf32>
    %39 = vector.shape_cast %38 : vector<1x256xf32> to vector<1x1x256xf32>
    %c0_25 = arith.constant 0 : index
    %c0_26 = arith.constant 0 : index
    %c0_27 = arith.constant 0 : index
    %40 = vector.load %arg10[%c0_25, %c0_26, %c0_27] : memref<1x1x256xf32, #tpu.memory_space<vmem>>, vector<1x1x256xf32>
    tpu.vector_store %arg10[%c0_25, %c0_26, %c0_27], %39 {strides = array<i32>} : memref<1x1x256xf32, #tpu.memory_space<vmem>>, vector<1x1x256xf32>,
    return
  }
  func.func @transform_0(%arg0: i32) -> (i32, i32) {
    %c0_i32 = arith.constant 0 : i32
    %c0_i32_0 = arith.constant 0 : i32
    return %arg0, %c0_i32 : i32, i32
  }
  func.func @transform_1(%arg0: i32) -> (i32, i32) {
    %c0_i32 = arith.constant 0 : i32
    %c0_i32_0 = arith.constant 0 : i32
    %c0_i32_1 = arith.constant 0 : i32
    return %c0_i32, %c0_i32_0 : i32, i32
  }
  func.func @transform_2(%arg0: i32) -> (i32, i32) {
    %c0_i32 = arith.constant 0 : i32
    %c0_i32_0 = arith.constant 0 : i32
    %c0_i32_1 = arith.constant 0 : i32
    return %c0_i32, %c0_i32_0 : i32, i32
  }
  func.func @transform_3(%arg0: i32) -> (i32, i32) {
    %c0_i32 = arith.constant 0 : i32
    %c0_i32_0 = arith.constant 0 : i32
    %c0_i32_1 = arith.constant 0 : i32
    return %c0_i32, %c0_i32_0 : i32, i32
  }
  func.func @transform_4(%arg0: i32) -> (i32, i32) {
    %c0_i32 = arith.constant 0 : i32
    %c0_i32_0 = arith.constant 0 : i32
    %c0_i32_1 = arith.constant 0 : i32
    return %c0_i32, %c0_i32_0 : i32, i32
  }
  func.func @transform_5(%arg0: i32) -> (i32, i32) {
    %c0_i32 = arith.constant 0 : i32
    %c0_i32_0 = arith.constant 0 : i32
    %c0_i32_1 = arith.constant 0 : i32
    return %c0_i32, %c0_i32_0 : i32, i32
  }
  func.func @transform_6(%arg0: i32) -> (i32, i32) {
    %c0_i32 = arith.constant 0 : i32
    %c0_i32_0 = arith.constant 0 : i32
    %c0_i32_1 = arith.constant 0 : i32
    return %c0_i32, %c0_i32_0 : i32, i32
  }
  func.func @transform_7(%arg0: i32) -> (i32, i32) {
    %c0_i32 = arith.constant 0 : i32
    %c0_i32_0 = arith.constant 0 : i32
    %c0_i32_1 = arith.constant 0 : i32
    return %c0_i32, %c0_i32_0 : i32, i32
  }
  func.func @transform_8(%arg0: i32) -> (i32, i32) {
    %c0_i32 = arith.constant 0 : i32
    %c0_i32_0 = arith.constant 0 : i32
    %c0_i32_1 = arith.constant 0 : i32
    return %c0_i32, %c0_i32_0 : i32, i32
  }
  func.func @transform_9(%arg0: i32) -> (i32, i32, i32) {
    %c0_i32 = arith.constant 0 : i32
    %c0_i32_0 = arith.constant 0 : i32
    %c0_i32_1 = arith.constant 0 : i32
    return %arg0, %c0_i32, %c0_i32_0 : i32, i32, i32
  }
}

</mosaic_0001>

<llo_original>
// kernel: tpu_custom_call.1
$region0: #{tpu_custom_call.1}
  #allocation0 [shape = 'u32[]', space=smem, size = 0x4, offset = 0x4, fixed_abs, tag = 'smem constant byte address 0x4 - core index']
  #allocation1 [shape = 'u32[72,128]{1,0:T(1,128)}', space=vmem, size = 0x9000, scoped, tag = 'internal scratch']
  #allocation2 [shape = 'f32[1,1]{1,0:T(1,128)S(6)}', space=smem, size = 0x200, scoped, tag = 'scoped memory for tpu_custom_call.1']
  %s0 = inlined_call_operand.hbm [shape: f32[8,32], index: 0, kind: input, shape index: {}]
  %s1 = inlined_call_operand.hbm [shape: bf16[32,128], index: 1, kind: input, shape index: {}]
  %s2 = inlined_call_operand.vmem [shape: f32[1,128], index: 2, kind: input, shape index: {}]
  %s3 = inlined_call_operand.hbm [shape: bf16[128,128], index: 3, kind: input, shape index: {}]
  %s4 = inlined_call_operand.vmem [shape: f32[1,128], index: 4, kind: input, shape index: {}]
  %s5 = inlined_call_operand.hbm [shape: bf16[128,128], index: 5, kind: input, shape index: {}]
  %s6 = inlined_call_operand.vmem [shape: f32[1,128], index: 6, kind: input, shape index: {}]
  %s7 = inlined_call_operand.vmem [shape: bf16[1,128], index: 7, kind: input, shape index: {}]
  %s8 = inlined_call_operand.<no memory space> [shape: f32[1,1], index: 8, kind: input, shape index: {}]
  %s9 = inlined_call_operand.hbm [shape: f32[1,1,256], index: 9, kind: output, shape index: {}]
  %s10 = sld [smem:[#allocation0]]
  $region62: #{tpu_custom_call.1} parent=0
    _
  %s12 = ssub.s32 1, %s10
  %s13 = scalar_select 0, %s12, %s10
  %14 = sst [smem:[#allocation2]] %s8
  $region1: #{tpu_custom_call.1} parent=0
    #allocation3 [shape = 'u8[131072]{0}', space=vmem, size = 0x20000, scoped, tag = 'input window, operand 0, single buffered']
    #allocation4 [shape = 's32[1]{0}', space=sflag, size = 0x4, scoped, tag = 'scoped memory for tpu_custom_call.1']
    #allocation5 [shape = 's32[1]{0}', space=sflag, size = 0x4, scoped, tag = 'scoped memory for tpu_custom_call.1']
    #allocation6 [shape = 'u8[8192]{0}', space=vmem, size = 0x2000, scoped, tag = 'input window, operand 1, single buffered']
    #allocation7 [shape = 's32[1]{0}', space=sflag, size = 0x4, scoped, tag = 'scoped memory for tpu_custom_call.1']
    #allocation8 [shape = 'u8[32768]{0}', space=vmem, size = 0x8000, scoped, tag = 'input window, operand 3, single buffered']
    #allocation9 [shape = 'u8[32768]{0}', space=vmem, size = 0x8000, scoped, tag = 'input window, operand 5, single buffered']
    #allocation10 [shape = 's32[1]{0}', space=sflag, size = 0x4, scoped, tag = 'scoped memory for tpu_custom_call.1']
    #allocation11 [shape = 'u8[1024]{0}', space=vmem, size = 0x400, scoped, tag = 'output window, operand 0, single buffered']
    %15 = vsyncpa [#allocation4], 0
    %16 = vsyncpa [#allocation7], 0
    %17 = vsyncpa [#allocation10], 0
    %18 = vsyncpa [#allocation5], 0
    // Predicated region
    $region2: #{tpu_custom_call.1} parent=1 // pred_check
      _
    $region3: #{tpu_custom_call.1} parent=1 // pred_check_branch
      %20 = sbr.rel (0) target = $region5
    $region4: #{tpu_custom_call.1} parent=1 // pred_region
      %22 = vsyncadd [#allocation4], 3968
      %s23 = sshll.u32 %s0, 4
      %s24 = int_to_ptr.hbm [resolvable:$true] %s23
      %s25 = sshll.u32 [#allocation3], 4
      %s26 = int_to_ptr.vmem [resolvable:$true] %s25
      %31 = dma.hbm_to_vmem [thread:$0]  %s24, 128, %s26, [#allocation4], 128, 128, 8
    $region5: #{tpu_custom_call.1} parent=1 // pred_fallthru
      _
    // Predicated region
    $region6: #{tpu_custom_call.1} parent=1 // pred_check
      _
    $region7: #{tpu_custom_call.1} parent=1 // pred_check_branch
      %33 = sbr.rel (0) target = $region9
    $region8: #{tpu_custom_call.1} parent=1 // pred_region
      %35 = vsyncadd [#allocation7], 0
      %s36 = sshll.u32 %s1, 4
      %s37 = int_to_ptr.hbm [resolvable:$true] %s36
      %s38 = sshll.u32 [#allocation6], 4
      %s39 = int_to_ptr.vmem [resolvable:$true] %s38
      %44 = dma.hbm_to_vmem [thread:$0]  %s37, 256, %s39, [#allocation7], 64, 64, 4
    $region9: #{tpu_custom_call.1} parent=1 // pred_fallthru
      _
    // Predicated region
    $region10: #{tpu_custom_call.1} parent=1 // pred_check
      _
    $region11: #{tpu_custom_call.1} parent=1 // pred_check_branch
      %46 = sbr.rel (0) target = $region13
    $region12: #{tpu_custom_call.1} parent=1 // pred_region
      _
    $region13: #{tpu_custom_call.1} parent=1 // pred_fallthru
      _
    // Predicated region
    $region14: #{tpu_custom_call.1} parent=1 // pred_check
      _
    $region15: #{tpu_custom_call.1} parent=1 // pred_check_branch
      %48 = sbr.rel (0) target = $region17
    $region16: #{tpu_custom_call.1} parent=1 // pred_region
      %50 = vsyncadd [#allocation7], 0
      %s51 = sshll.u32 %s3, 4
      %s52 = int_to_ptr.hbm [resolvable:$true] %s51
      %s53 = sshll.u32 [#allocation8], 4
      %s54 = int_to_ptr.vmem [resolvable:$true] %s53
      %59 = dma.hbm_to_vmem [thread:$0]  %s52, 1024, %s54, [#allocation7], 64, 64, 4
    $region17: #{tpu_custom_call.1} parent=1 // pred_fallthru
      _
    // Predicated region
    $region18: #{tpu_custom_call.1} parent=1 // pred_check
      _
    $region19: #{tpu_custom_call.1} parent=1 // pred_check_branch
      %61 = sbr.rel (0) target = $region21
    $region20: #{tpu_custom_call.1} parent=1 // pred_region
      _
    $region21: #{tpu_custom_call.1} parent=1 // pred_fallthru
      _
    // Predicated region
    $region22: #{tpu_custom_call.1} parent=1 // pred_check
      _
    $region23: #{tpu_custom_call.1} parent=1 // pred_check_branch
      %63 = sbr.rel (0) target = $region25
    $region24: #{tpu_custom_call.1} parent=1 // pred_region
      %65 = vsyncadd [#allocation10], 0
      %s66 = sshll.u32 %s5, 4
      %s67 = int_to_ptr.hbm [resolvable:$true] %s66
      %s68 = sshll.u32 [#allocation9], 4
      %s69 = int_to_ptr.vmem [resolvable:$true] %s68
      %74 = dma.hbm_to_vmem [thread:$0]  %s67, 1024, %s69, [#allocation10], 64, 64, 4
    $region25: #{tpu_custom_call.1} parent=1 // pred_fallthru
      _
    // Predicated region
    $region26: #{tpu_custom_call.1} parent=1 // pred_check
      _
    $region27: #{tpu_custom_call.1} parent=1 // pred_check_branch
      %76 = sbr.rel (0) target = $region29
    $region28: #{tpu_custom_call.1} parent=1 // pred_region
      _
    $region29: #{tpu_custom_call.1} parent=1 // pred_fallthru
      _
    // Predicated region
    $region30: #{tpu_custom_call.1} parent=1 // pred_check
      _
    $region31: #{tpu_custom_call.1} parent=1 // pred_check_branch
      %78 = sbr.rel (0) target = $region33
    $region32: #{tpu_custom_call.1} parent=1 // pred_region
      _
    $region33: #{tpu_custom_call.1} parent=1 // pred_fallthru
      _
    // Predicated region
    $region34: #{tpu_custom_call.1} parent=1 // pred_check
      _
    $region35: #{tpu_custom_call.1} parent=1 // pred_check_branch
      %80 = sbr.rel (0) target = $region37
    $region36: #{tpu_custom_call.1} parent=1 // pred_region
      _
    $region37: #{tpu_custom_call.1} parent=1 // pred_fallthru
      _
    // Predicated region
    $region38: #{tpu_custom_call.1} parent=1 // pred_check
      _
    $region39: #{tpu_custom_call.1} parent=1 // pred_check_branch
      %82 = sbr.rel (0) target = $region41
    $region40: #{tpu_custom_call.1} parent=1 // pred_region
      %84 = dma.done [#allocation4], 4096
    $region41: #{tpu_custom_call.1} parent=1 // pred_fallthru
      _
    // Predicated region
    $region42: #{tpu_custom_call.1} parent=1 // pred_check
      _
    $region43: #{tpu_custom_call.1} parent=1 // pred_check_branch
      %86 = sbr.rel (0) target = $region45
    $region44: #{tpu_custom_call.1} parent=1 // pred_region
      %88 = dma.done [#allocation7], 256
    $region45: #{tpu_custom_call.1} parent=1 // pred_fallthru
      _
    // Predicated region
    $region46: #{tpu_custom_call.1} parent=1 // pred_check
      _
    $region47: #{tpu_custom_call.1} parent=1 // pred_check_branch
      %90 = sbr.rel (0) target = $region49
    $region48: #{tpu_custom_call.1} parent=1 // pred_region
      %92 = dma.done [#allocation7], 1024
    $region49: #{tpu_custom_call.1} parent=1 // pred_fallthru
      _
    // Predicated region
    $region50: #{tpu_custom_call.1} parent=1 // pred_check
      _
    $region51: #{tpu_custom_call.1} parent=1 // pred_check_branch
      %94 = sbr.rel (0) target = $region53
    $region52: #{tpu_custom_call.1} parent=1 // pred_region
      %96 = dma.done [#allocation10], 1024
    $region53: #{tpu_custom_call.1} parent=1 // pred_fallthru
      _
    %v98 = vld [vmem:[#allocation3] sm:$0xff]
    %v99 = vld [vmem:[#allocation3 + $0x8] sm:$0xff]
    %v100 = vld [vmem:[#allocation3 + $0x10] sm:$0xff]
    %v101 = vld [vmem:[#allocation3 + $0x18] sm:$0xff]
    %v102 = vld [vmem:[#allocation3 + $0x20] sm:$0xff]
    %v103 = vld [vmem:[#allocation3 + $0x28] sm:$0xff]
    %v104 = vld [vmem:[#allocation3 + $0x30] sm:$0xff]
    %v105 = vld [vmem:[#allocation3 + $0x38] sm:$0xff]
    %v106 = vld [vmem:[#allocation3 + $0x40] sm:$0xff]
    %v107 = vld [vmem:[#allocation3 + $0x48] sm:$0xff]
    %v108 = vld [vmem:[#allocation3 + $0x50] sm:$0xff]
    %v109 = vld [vmem:[#allocation3 + $0x58] sm:$0xff]
    %v110 = vld [vmem:[#allocation3 + $0x60] sm:$0xff]
    %v111 = vld [vmem:[#allocation3 + $0x68] sm:$0xff]
    %v112 = vld [vmem:[#allocation3 + $0x70] sm:$0xff]
    %v113 = vld [vmem:[#allocation3 + $0x78] sm:$0xff]
    %v114 = vld [vmem:[#allocation3 + $0x80] sm:$0xff]
    %v115 = vld [vmem:[#allocation3 + $0x88] sm:$0xff]
    %v116 = vld [vmem:[#allocation3 + $0x90] sm:$0xff]
    %v117 = vld [vmem:[#allocation3 + $0x98] sm:$0xff]
    %v118 = vld [vmem:[#allocation3 + $0xa0] sm:$0xff]
    %v119 = vld [vmem:[#allocation3 + $0xa8] sm:$0xff]
    %v120 = vld [vmem:[#allocation3 + $0xb0] sm:$0xff]
    %v121 = vld [vmem:[#allocation3 + $0xb8] sm:$0xff]
    %v122 = vld [vmem:[#allocation3 + $0xc0] sm:$0xff]
    %v123 = vld [vmem:[#allocation3 + $0xc8] sm:$0xff]
    %v124 = vld [vmem:[#allocation3 + $0xd0] sm:$0xff]
    %v125 = vld [vmem:[#allocation3 + $0xd8] sm:$0xff]
    %v126 = vld [vmem:[#allocation3 + $0xe0] sm:$0xff]
    %v127 = vld [vmem:[#allocation3 + $0xe8] sm:$0xff]
    %v128 = vld [vmem:[#allocation3 + $0xf0] sm:$0xff]
    %v129 = vld [vmem:[#allocation3 + $0xf8] sm:$0xff]
    %v130 = vpack.c.bf16 %v99, %v98
    %v131 = vpack.c.bf16 %v101, %v100
    %v132 = vpack.c.bf16 %v103, %v102
    %v133 = vpack.c.bf16 %v105, %v104
    %v134 = vpack.c.bf16 %v107, %v106
    %v135 = vpack.c.bf16 %v109, %v108
    %v136 = vpack.c.bf16 %v111, %v110
    %v137 = vpack.c.bf16 %v113, %v112
    %v138 = vpack.c.bf16 %v115, %v114
    %v139 = vpack.c.bf16 %v117, %v116
    %v140 = vpack.c.bf16 %v119, %v118
    %v141 = vpack.c.bf16 %v121, %v120
    %v142 = vpack.c.bf16 %v123, %v122
    %v143 = vpack.c.bf16 %v125, %v124
    %v144 = vpack.c.bf16 %v127, %v126
    %v145 = vpack.c.bf16 %v129, %v128
    %v146 = vld [vmem:[#allocation6] sm:$0xf]
    %v147 = vld [vmem:[#allocation6 + $0x4] sm:$0xf]
    %v148 = vld [vmem:[#allocation6 + $0x8] sm:$0xf]
    %v149 = vld [vmem:[#allocation6 + $0xc] sm:$0xf]
    %v150 = vld [vmem:[%s2] sm:$0x1]
    %v152 = vperm.slane %v150, 0
    %v158 = vunpack.c.l.b16 %v146
    %v159 = vunpack.c.l.b16 %v147
    %v160 = vunpack.c.l.b16 %v148
    %v161 = vunpack.c.l.b16 %v149
    %v162 = vpack.c.b16 %v159, %v158
    %v163 = vpack.c.b16 %v161, %v160
    %vm166 = vcmask 261120
    %v168 = vsel %vm166, %v130, 0
    %v171 = vsel %vm166, %v131, 0
    %v174 = vsel %vm166, %v132, 0
    %v177 = vsel %vm166, %v133, 0
    %v180 = vsel %vm166, %v134, 0
    %v183 = vsel %vm166, %v135, 0
    %v186 = vsel %vm166, %v136, 0
    %v189 = vsel %vm166, %v137, 0
    %v192 = vsel %vm166, %v138, 0
    %v195 = vsel %vm166, %v139, 0
    %v198 = vsel %vm166, %v140, 0
    %v201 = vsel %vm166, %v141, 0
    %v204 = vsel %vm166, %v142, 0
    %v207 = vsel %vm166, %v143, 0
    %v210 = vsel %vm166, %v144, 0
    %v213 = vsel %vm166, %v145, 0
    %215 = vmatpush.bf16.msra.mxu0 0
    %216 = vmatpush.bf16.msra.mxu0 0
    %217 = vmatpush.bf16.msra.mxu0 0
    %218 = vmatpush.bf16.msra.mxu0 0
    %219 = vmatpush.bf16.msra.mxu0 0
    %220 = vmatpush.bf16.msra.mxu0 0
    %221 = vmatpush.bf16.msra.mxu0 %v163
    %222 = vmatpush.bf16.msra.mxu0 %v162
    %223 = vmatmul.bf16.gmra.mxu0 %v168
    %v224 = vpop.f32.mrf.mxu0
    %v225 = vadd.f32 %v152, %v224
    %v226 = vpop.f32.mrf.mxu0
    %v227 = vadd.f32 %v152, %v226
    %228 = vmatmul.bf16.gmra.mxu0 %v171
    %v229 = vpop.f32.mrf.mxu0
    %v230 = vadd.f32 %v152, %v229
    %v231 = vpop.f32.mrf.mxu0
    %v232 = vadd.f32 %v152, %v231
    %233 = vmatmul.bf16.gmra.mxu0 %v174
    %v234 = vpop.f32.mrf.mxu0
    %v235 = vadd.f32 %v152, %v234
    %v236 = vpop.f32.mrf.mxu0
    %v237 = vadd.f32 %v152, %v236
    %238 = vmatmul.bf16.gmra.mxu0 %v177
    %v239 = vpop.f32.mrf.mxu0
    %v240 = vadd.f32 %v152, %v239
    %v241 = vpop.f32.mrf.mxu0
    %v242 = vadd.f32 %v152, %v241
    %243 = vmatmul.bf16.gmra.mxu0 %v180
    %v244 = vpop.f32.mrf.mxu0
    %v245 = vadd.f32 %v152, %v244
    %v246 = vpop.f32.mrf.mxu0
    %v247 = vadd.f32 %v152, %v246
    %248 = vmatmul.bf16.gmra.mxu0 %v183
    %v249 = vpop.f32.mrf.mxu0
    %v250 = vadd.f32 %v152, %v249
    %v251 = vpop.f32.mrf.mxu0
    %v252 = vadd.f32 %v152, %v251
    %253 = vmatmul.bf16.gmra.mxu0 %v186
    %v254 = vpop.f32.mrf.mxu0
    %v255 = vadd.f32 %v152, %v254
    %v256 = vpop.f32.mrf.mxu0
    %v257 = vadd.f32 %v152, %v256
    %258 = vmatmul.bf16.gmra.mxu0 %v189
    %v259 = vpop.f32.mrf.mxu0
    %v260 = vadd.f32 %v152, %v259
    %v261 = vpop.f32.mrf.mxu0
    %v262 = vadd.f32 %v152, %v261
    %263 = vmatmul.bf16.gmra.mxu0 %v192
    %v264 = vpop.f32.mrf.mxu0
    %v265 = vadd.f32 %v152, %v264
    %v266 = vpop.f32.mrf.mxu0
    %v267 = vadd.f32 %v152, %v266
    %268 = vmatmul.bf16.gmra.mxu0 %v195
    %v269 = vpop.f32.mrf.mxu0
    %v270 = vadd.f32 %v152, %v269
    %v271 = vpop.f32.mrf.mxu0
    %v272 = vadd.f32 %v152, %v271
    %273 = vmatmul.bf16.gmra.mxu0 %v198
    %v274 = vpop.f32.mrf.mxu0
    %v275 = vadd.f32 %v152, %v274
    %v276 = vpop.f32.mrf.mxu0
    %v277 = vadd.f32 %v152, %v276
    %278 = vmatmul.bf16.gmra.mxu0 %v201
    %v279 = vpop.f32.mrf.mxu0
    %v280 = vadd.f32 %v152, %v279
    %v281 = vpop.f32.mrf.mxu0
    %v282 = vadd.f32 %v152, %v281
    %283 = vmatmul.bf16.gmra.mxu0 %v204
    %v284 = vpop.f32.mrf.mxu0
    %v285 = vadd.f32 %v152, %v284
    %v286 = vpop.f32.mrf.mxu0
    %v287 = vadd.f32 %v152, %v286
    %288 = vmatmul.bf16.gmra.mxu0 %v207
    %v289 = vpop.f32.mrf.mxu0
    %v290 = vadd.f32 %v152, %v289
    %v291 = vpop.f32.mrf.mxu0
    %v292 = vadd.f32 %v152, %v291
    %293 = vmatmul.bf16.gmra.mxu0 %v210
    %v294 = vpop.f32.mrf.mxu0
    %v295 = vadd.f32 %v152, %v294
    %v296 = vpop.f32.mrf.mxu0
    %v297 = vadd.f32 %v152, %v296
    %298 = vmatmul.bf16.gmra.mxu0 %v213
    %v299 = vpop.f32.mrf.mxu0
    %v300 = vadd.f32 %v152, %v299
    %v301 = vpop.f32.mrf.mxu0
    %v302 = vadd.f32 %v152, %v301
    %303 = vdwg.mxu0
    %v304 = vpack.c.bf16 %v227, %v225
    %v305 = vpack.c.bf16 %v232, %v230
    %v306 = vpack.c.bf16 %v237, %v235
    %v307 = vpack.c.bf16 %v242, %v240
    %v308 = vpack.c.bf16 %v247, %v245
    %v309 = vpack.c.bf16 %v252, %v250
    %v310 = vpack.c.bf16 %v257, %v255
    %v311 = vpack.c.bf16 %v262, %v260
    %v312 = vpack.c.bf16 %v267, %v265
    %v313 = vpack.c.bf16 %v272, %v270
    %v314 = vpack.c.bf16 %v277, %v275
    %v315 = vpack.c.bf16 %v282, %v280
    %v316 = vpack.c.bf16 %v287, %v285
    %v317 = vpack.c.bf16 %v292, %v290
    %v318 = vpack.c.bf16 %v297, %v295
    %v319 = vpack.c.bf16 %v302, %v300
    %v320 = vunpack.c.l.bf16 %v304
    %v321 = vunpack.c.h.bf16 %v304
    %v322 = vunpack.c.l.bf16 %v305
    %v323 = vunpack.c.h.bf16 %v305
    %v324 = vunpack.c.l.bf16 %v306
    %v325 = vunpack.c.h.bf16 %v306
    %v326 = vunpack.c.l.bf16 %v307
    %v327 = vunpack.c.h.bf16 %v307
    %v328 = vunpack.c.l.bf16 %v308
    %v329 = vunpack.c.h.bf16 %v308
    %v330 = vunpack.c.l.bf16 %v309
    %v331 = vunpack.c.h.bf16 %v309
    %v332 = vunpack.c.l.bf16 %v310
    %v333 = vunpack.c.h.bf16 %v310
    %v334 = vunpack.c.l.bf16 %v311
    %v335 = vunpack.c.h.bf16 %v311
    %v336 = vunpack.c.l.bf16 %v312
    %v337 = vunpack.c.h.bf16 %v312
    %v338 = vunpack.c.l.bf16 %v313
    %v339 = vunpack.c.h.bf16 %v313
    %v340 = vunpack.c.l.bf16 %v314
    %v341 = vunpack.c.h.bf16 %v314
    %v342 = vunpack.c.l.bf16 %v315
    %v343 = vunpack.c.h.bf16 %v315
    %v344 = vunpack.c.l.bf16 %v316
    %v345 = vunpack.c.h.bf16 %v316
    %v346 = vunpack.c.l.bf16 %v317
    %v347 = vunpack.c.h.bf16 %v317
    %v348 = vunpack.c.l.bf16 %v318
    %v349 = vunpack.c.h.bf16 %v318
    %v350 = vunpack.c.l.bf16 %v319
    %v351 = vunpack.c.h.bf16 %v319
    %v352 = vtanh.pop %v320
    %v353 = vtanh.pop %v321
    %v354 = vtanh.pop %v322
    %v355 = vtanh.pop %v323
    %v356 = vtanh.pop %v324
    %v357 = vtanh.pop %v325
    %v358 = vtanh.pop %v326
    %v359 = vtanh.pop %v327
    %v360 = vtanh.pop %v328
    %v361 = vtanh.pop %v329
    %v362 = vtanh.pop %v330
    %v363 = vtanh.pop %v331
    %v364 = vtanh.pop %v332
    %v365 = vtanh.pop %v333
    %v366 = vtanh.pop %v334
    %v367 = vtanh.pop %v335
    %v368 = vtanh.pop %v336
    %v369 = vtanh.pop %v337
    %v370 = vtanh.pop %v338
    %v371 = vtanh.pop %v339
    %v372 = vtanh.pop %v340
    %v373 = vtanh.pop %v341
    %v374 = vtanh.pop %v342
    %v375 = vtanh.pop %v343
    %v376 = vtanh.pop %v344
    %v377 = vtanh.pop %v345
    %v378 = vtanh.pop %v346
    %v379 = vtanh.pop %v347
    %v380 = vtanh.pop %v348
    %v381 = vtanh.pop %v349
    %v382 = vtanh.pop %v350
    %v383 = vtanh.pop %v351
    %v384 = vpack.c.bf16 %v353, %v352
    %v385 = vpack.c.bf16 %v355, %v354
    %v386 = vpack.c.bf16 %v357, %v356
    %v387 = vpack.c.bf16 %v359, %v358
    %v388 = vpack.c.bf16 %v361, %v360
    %v389 = vpack.c.bf16 %v363, %v362
    %v390 = vpack.c.bf16 %v365, %v364
    %v391 = vpack.c.bf16 %v367, %v366
    %v392 = vpack.c.bf16 %v369, %v368
    %v393 = vpack.c.bf16 %v371, %v370
    %v394 = vpack.c.bf16 %v373, %v372
    %v395 = vpack.c.bf16 %v375, %v374
    %v396 = vpack.c.bf16 %v377, %v376
    %v397 = vpack.c.bf16 %v379, %v378
    %v398 = vpack.c.bf16 %v381, %v380
    %v399 = vpack.c.bf16 %v383, %v382
    %v400 = vld [vmem:[#allocation8] sm:$0xf]
    %v401 = vld [vmem:[#allocation8 + $0x4] sm:$0xf]
    %v402 = vld [vmem:[#allocation8 + $0x8] sm:$0xf]
    %v403 = vld [vmem:[#allocation8 + $0xc] sm:$0xf]
    %v404 = vld [vmem:[#allocation8 + $0x10] sm:$0xf]
    %v405 = vld [vmem:[#allocation8 + $0x14] sm:$0xf]
    %v406 = vld [vmem:[#allocation8 + $0x18] sm:$0xf]
    %v407 = vld [vmem:[#allocation8 + $0x1c] sm:$0xf]
    %v408 = vld [vmem:[#allocation8 + $0x20] sm:$0xf]
    %v409 = vld [vmem:[#allocation8 + $0x24] sm:$0xf]
    %v410 = vld [vmem:[#allocation8 + $0x28] sm:$0xf]
    %v411 = vld [vmem:[#allocation8 + $0x2c] sm:$0xf]
    %v412 = vld [vmem:[#allocation8 + $0x30] sm:$0xf]
    %v413 = vld [vmem:[#allocation8 + $0x34] sm:$0xf]
    %v414 = vld [vmem:[#allocation8 + $0x38] sm:$0xf]
    %v415 = vld [vmem:[#allocation8 + $0x3c] sm:$0xf]
    %v416 = vld [vmem:[%s4] sm:$0x1]
    %v418 = vperm.slane %v416, 0
    %v436 = vunpack.c.l.b16 %v400
    %v437 = vunpack.c.l.b16 %v401
    %v438 = vunpack.c.l.b16 %v402
    %v439 = vunpack.c.l.b16 %v403
    %v440 = vunpack.c.l.b16 %v404
    %v441 = vunpack.c.l.b16 %v405
    %v442 = vunpack.c.l.b16 %v406
    %v443 = vunpack.c.l.b16 %v407
    %v444 = vunpack.c.l.b16 %v408
    %v445 = vunpack.c.l.b16 %v409
    %v446 = vunpack.c.l.b16 %v410
    %v447 = vunpack.c.l.b16 %v411
    %v448 = vunpack.c.l.b16 %v412
    %v449 = vunpack.c.l.b16 %v413
    %v450 = vunpack.c.l.b16 %v414
    %v451 = vunpack.c.l.b16 %v415
    %v452 = vpack.c.b16 %v437, %v436
    %v453 = vpack.c.b16 %v439, %v438
    %v454 = vpack.c.b16 %v441, %v440
    %v455 = vpack.c.b16 %v443, %v442
    %v456 = vpack.c.b16 %v445, %v444
    %v457 = vpack.c.b16 %v447, %v446
    %v458 = vpack.c.b16 %v449, %v448
    %v459 = vpack.c.b16 %v451, %v450
    %468 = vmatpush.bf16.msra.mxu0 %v459
    %469 = vmatpush.bf16.msra.mxu0 %v458
    %470 = vmatpush.bf16.msra.mxu0 %v457
    %471 = vmatpush.bf16.msra.mxu0 %v456
    %472 = vmatpush.bf16.msra.mxu0 %v455
    %473 = vmatpush.bf16.msra.mxu0 %v454
    %474 = vmatpush.bf16.msra.mxu0 %v453
    %475 = vmatpush.bf16.msra.mxu0 %v452
    %476 = vmatmul.bf16.gmra.mxu0 %v384
    %v477 = vpop.f32.mrf.mxu0
    %v478 = vadd.f32 %v418, %v477
    %v479 = vpop.f32.mrf.mxu0
    %v480 = vadd.f32 %v418, %v479
    %481 = vmatmul.bf16.gmra.mxu0 %v385
    %v482 = vpop.f32.mrf.mxu0
    %v483 = vadd.f32 %v418, %v482
    %v484 = vpop.f32.mrf.mxu0
    %v485 = vadd.f32 %v418, %v484
    %486 = vmatmul.bf16.gmra.mxu0 %v386
    %v487 = vpop.f32.mrf.mxu0
    %v488 = vadd.f32 %v418, %v487
    %v489 = vpop.f32.mrf.mxu0
    %v490 = vadd.f32 %v418, %v489
    %491 = vmatmul.bf16.gmra.mxu0 %v387
    %v492 = vpop.f32.mrf.mxu0
    %v493 = vadd.f32 %v418, %v492
    %v494 = vpop.f32.mrf.mxu0
    %v495 = vadd.f32 %v418, %v494
    %496 = vmatmul.bf16.gmra.mxu0 %v388
    %v497 = vpop.f32.mrf.mxu0
    %v498 = vadd.f32 %v418, %v497
    %v499 = vpop.f32.mrf.mxu0
    %v500 = vadd.f32 %v418, %v499
    %501 = vmatmul.bf16.gmra.mxu0 %v389
    %v502 = vpop.f32.mrf.mxu0
    %v503 = vadd.f32 %v418, %v502
    %v504 = vpop.f32.mrf.mxu0
    %v505 = vadd.f32 %v418, %v504
    %506 = vmatmul.bf16.gmra.mxu0 %v390
    %v507 = vpop.f32.mrf.mxu0
    %v508 = vadd.f32 %v418, %v507
    %v509 = vpop.f32.mrf.mxu0
    %v510 = vadd.f32 %v418, %v509
    %511 = vmatmul.bf16.gmra.mxu0 %v391
    %v512 = vpop.f32.mrf.mxu0
    %v513 = vadd.f32 %v418, %v512
    %v514 = vpop.f32.mrf.mxu0
    %v515 = vadd.f32 %v418, %v514
    %516 = vmatmul.bf16.gmra.mxu0 %v392
    %v517 = vpop.f32.mrf.mxu0
    %v518 = vadd.f32 %v418, %v517
    %v519 = vpop.f32.mrf.mxu0
    %v520 = vadd.f32 %v418, %v519
    %521 = vmatmul.bf16.gmra.mxu0 %v393
    %v522 = vpop.f32.mrf.mxu0
    %v523 = vadd.f32 %v418, %v522
    %v524 = vpop.f32.mrf.mxu0
    %v525 = vadd.f32 %v418, %v524
    %526 = vmatmul.bf16.gmra.mxu0 %v394
    %v527 = vpop.f32.mrf.mxu0
    %v528 = vadd.f32 %v418, %v527
    %v529 = vpop.f32.mrf.mxu0
    %v530 = vadd.f32 %v418, %v529
    %531 = vmatmul.bf16.gmra.mxu0 %v395
    %v532 = vpop.f32.mrf.mxu0
    %v533 = vadd.f32 %v418, %v532
    %v534 = vpop.f32.mrf.mxu0
    %v535 = vadd.f32 %v418, %v534
    %536 = vmatmul.bf16.gmra.mxu0 %v396
    %v537 = vpop.f32.mrf.mxu0
    %v538 = vadd.f32 %v418, %v537
    %v539 = vpop.f32.mrf.mxu0
    %v540 = vadd.f32 %v418, %v539
    %541 = vmatmul.bf16.gmra.mxu0 %v397
    %v542 = vpop.f32.mrf.mxu0
    %v543 = vadd.f32 %v418, %v542
    %v544 = vpop.f32.mrf.mxu0
    %v545 = vadd.f32 %v418, %v544
    %546 = vmatmul.bf16.gmra.mxu0 %v398
    %v547 = vpop.f32.mrf.mxu0
    %v548 = vadd.f32 %v418, %v547
    %v549 = vpop.f32.mrf.mxu0
    %v550 = vadd.f32 %v418, %v549
    %551 = vmatmul.bf16.gmra.mxu0 %v399
    %v552 = vpop.f32.mrf.mxu0
    %v553 = vadd.f32 %v418, %v552
    %v554 = vpop.f32.mrf.mxu0
    %v555 = vadd.f32 %v418, %v554
    %556 = vdwg.mxu0
    %v557 = vpack.c.bf16 %v480, %v478
    %v558 = vpack.c.bf16 %v485, %v483
    %v559 = vpack.c.bf16 %v490, %v488
    %v560 = vpack.c.bf16 %v495, %v493
    %v561 = vpack.c.bf16 %v500, %v498
    %v562 = vpack.c.bf16 %v505, %v503
    %v563 = vpack.c.bf16 %v510, %v508
    %v564 = vpack.c.bf16 %v515, %v513
    %v565 = vpack.c.bf16 %v520, %v518
    %v566 = vpack.c.bf16 %v525, %v523
    %v567 = vpack.c.bf16 %v530, %v528
    %v568 = vpack.c.bf16 %v535, %v533
    %v569 = vpack.c.bf16 %v540, %v538
    %v570 = vpack.c.bf16 %v545, %v543
    %v571 = vpack.c.bf16 %v550, %v548
    %v572 = vpack.c.bf16 %v555, %v553
    %v573 = vunpack.c.l.bf16 %v557
    %v574 = vunpack.c.h.bf16 %v557
    %v575 = vunpack.c.l.bf16 %v558
    %v576 = vunpack.c.h.bf16 %v558
    %v577 = vunpack.c.l.bf16 %v559
    %v578 = vunpack.c.h.bf16 %v559
    %v579 = vunpack.c.l.bf16 %v560
    %v580 = vunpack.c.h.bf16 %v560
    %v581 = vunpack.c.l.bf16 %v561
    %v582 = vunpack.c.h.bf16 %v561
    %v583 = vunpack.c.l.bf16 %v562
    %v584 = vunpack.c.h.bf16 %v562
    %v585 = vunpack.c.l.bf16 %v563
    %v586 = vunpack.c.h.bf16 %v563
    %v587 = vunpack.c.l.bf16 %v564
    %v588 = vunpack.c.h.bf16 %v564
    %v589 = vunpack.c.l.bf16 %v565
    %v590 = vunpack.c.h.bf16 %v565
    %v591 = vunpack.c.l.bf16 %v566
    %v592 = vunpack.c.h.bf16 %v566
    %v593 = vunpack.c.l.bf16 %v567
    %v594 = vunpack.c.h.bf16 %v567
    %v595 = vunpack.c.l.bf16 %v568
    %v596 = vunpack.c.h.bf16 %v568
    %v597 = vunpack.c.l.bf16 %v569
    %v598 = vunpack.c.h.bf16 %v569
    %v599 = vunpack.c.l.bf16 %v570
    %v600 = vunpack.c.h.bf16 %v570
    %v601 = vunpack.c.l.bf16 %v571
    %v602 = vunpack.c.h.bf16 %v571
    %v603 = vunpack.c.l.bf16 %v572
    %v604 = vunpack.c.h.bf16 %v572
    %v605 = vtanh.pop %v573
    %v606 = vtanh.pop %v574
    %v607 = vtanh.pop %v575
    %v608 = vtanh.pop %v576
    %v609 = vtanh.pop %v577
    %v610 = vtanh.pop %v578
    %v611 = vtanh.pop %v579
    %v612 = vtanh.pop %v580
    %v613 = vtanh.pop %v581
    %v614 = vtanh.pop %v582
    %v615 = vtanh.pop %v583
    %v616 = vtanh.pop %v584
    %v617 = vtanh.pop %v585
    %v618 = vtanh.pop %v586
    %v619 = vtanh.pop %v587
    %v620 = vtanh.pop %v588
    %v621 = vtanh.pop %v589
    %v622 = vtanh.pop %v590
    %v623 = vtanh.pop %v591
    %v624 = vtanh.pop %v592
    %v625 = vtanh.pop %v593
    %v626 = vtanh.pop %v594
    %v627 = vtanh.pop %v595
    %v628 = vtanh.pop %v596
    %v629 = vtanh.pop %v597
    %v630 = vtanh.pop %v598
    %v631 = vtanh.pop %v599
    %v632 = vtanh.pop %v600
    %v633 = vtanh.pop %v601
    %v634 = vtanh.pop %v602
    %v635 = vtanh.pop %v603
    %v636 = vtanh.pop %v604
    %v637 = vpack.c.bf16 %v606, %v605
    %v638 = vpack.c.bf16 %v608, %v607
    %v639 = vpack.c.bf16 %v610, %v609
    %v640 = vpack.c.bf16 %v612, %v611
    %v641 = vpack.c.bf16 %v614, %v613
    %v642 = vpack.c.bf16 %v616, %v615
    %v643 = vpack.c.bf16 %v618, %v617
    %v644 = vpack.c.bf16 %v620, %v619
    %v645 = vpack.c.bf16 %v622, %v621
    %v646 = vpack.c.bf16 %v624, %v623
    %v647 = vpack.c.bf16 %v626, %v625
    %v648 = vpack.c.bf16 %v628, %v627
    %v649 = vpack.c.bf16 %v630, %v629
    %v650 = vpack.c.bf16 %v632, %v631
    %v651 = vpack.c.bf16 %v634, %v633
    %v652 = vpack.c.bf16 %v636, %v635
    %v653 = vld [vmem:[#allocation9] sm:$0xf]
    %v654 = vld [vmem:[#allocation9 + $0x4] sm:$0xf]
    %v655 = vld [vmem:[#allocation9 + $0x8] sm:$0xf]
    %v656 = vld [vmem:[#allocation9 + $0xc] sm:$0xf]
    %v657 = vld [vmem:[#allocation9 + $0x10] sm:$0xf]
    %v658 = vld [vmem:[#allocation9 + $0x14] sm:$0xf]
    %v659 = vld [vmem:[#allocation9 + $0x18] sm:$0xf]
    %v660 = vld [vmem:[#allocation9 + $0x1c] sm:$0xf]
    %v661 = vld [vmem:[#allocation9 + $0x20] sm:$0xf]
    %v662 = vld [vmem:[#allocation9 + $0x24] sm:$0xf]
    %v663 = vld [vmem:[#allocation9 + $0x28] sm:$0xf]
    %v664 = vld [vmem:[#allocation9 + $0x2c] sm:$0xf]
    %v665 = vld [vmem:[#allocation9 + $0x30] sm:$0xf]
    %v666 = vld [vmem:[#allocation9 + $0x34] sm:$0xf]
    %v667 = vld [vmem:[#allocation9 + $0x38] sm:$0xf]
    %v668 = vld [vmem:[#allocation9 + $0x3c] sm:$0xf]
    %v669 = vld [vmem:[%s6] sm:$0x1]
    %v671 = vperm.slane %v669, 0
    %v689 = vunpack.c.l.b16 %v653
    %v690 = vunpack.c.l.b16 %v654
    %v691 = vunpack.c.l.b16 %v655
    %v692 = vunpack.c.l.b16 %v656
    %v693 = vunpack.c.l.b16 %v657
    %v694 = vunpack.c.l.b16 %v658
    %v695 = vunpack.c.l.b16 %v659
    %v696 = vunpack.c.l.b16 %v660
    %v697 = vunpack.c.l.b16 %v661
    %v698 = vunpack.c.l.b16 %v662
    %v699 = vunpack.c.l.b16 %v663
    %v700 = vunpack.c.l.b16 %v664
    %v701 = vunpack.c.l.b16 %v665
    %v702 = vunpack.c.l.b16 %v666
    %v703 = vunpack.c.l.b16 %v667
    %v704 = vunpack.c.l.b16 %v668
    %v705 = vpack.c.b16 %v690, %v689
    %v706 = vpack.c.b16 %v692, %v691
    %v707 = vpack.c.b16 %v694, %v693
    %v708 = vpack.c.b16 %v696, %v695
    %v709 = vpack.c.b16 %v698, %v697
    %v710 = vpack.c.b16 %v700, %v699
    %v711 = vpack.c.b16 %v702, %v701
    %v712 = vpack.c.b16 %v704, %v703
    %721 = vmatpush.bf16.msra.mxu0 %v712
    %722 = vmatpush.bf16.msra.mxu0 %v711
    %723 = vmatpush.bf16.msra.mxu0 %v710
    %724 = vmatpush.bf16.msra.mxu0 %v709
    %725 = vmatpush.bf16.msra.mxu0 %v708
    %726 = vmatpush.bf16.msra.mxu0 %v707
    %727 = vmatpush.bf16.msra.mxu0 %v706
    %728 = vmatpush.bf16.msra.mxu0 %v705
    %729 = vmatmul.bf16.gmra.mxu0 %v637
    %v730 = vpop.f32.mrf.mxu0
    %v731 = vadd.f32 %v671, %v730
    %v732 = vpop.f32.mrf.mxu0
    %v733 = vadd.f32 %v671, %v732
    %734 = vmatmul.bf16.gmra.mxu0 %v638
    %v735 = vpop.f32.mrf.mxu0
    %v736 = vadd.f32 %v671, %v735
    %v737 = vpop.f32.mrf.mxu0
    %v738 = vadd.f32 %v671, %v737
    %739 = vmatmul.bf16.gmra.mxu0 %v639
    %v740 = vpop.f32.mrf.mxu0
    %v741 = vadd.f32 %v671, %v740
    %v742 = vpop.f32.mrf.mxu0
    %v743 = vadd.f32 %v671, %v742
    %744 = vmatmul.bf16.gmra.mxu0 %v640
    %v745 = vpop.f32.mrf.mxu0
    %v746 = vadd.f32 %v671, %v745
    %v747 = vpop.f32.mrf.mxu0
    %v748 = vadd.f32 %v671, %v747
    %749 = vmatmul.bf16.gmra.mxu0 %v641
    %v750 = vpop.f32.mrf.mxu0
    %v751 = vadd.f32 %v671, %v750
    %v752 = vpop.f32.mrf.mxu0
    %v753 = vadd.f32 %v671, %v752
    %754 = vmatmul.bf16.gmra.mxu0 %v642
    %v755 = vpop.f32.mrf.mxu0
    %v756 = vadd.f32 %v671, %v755
    %v757 = vpop.f32.mrf.mxu0
    %v758 = vadd.f32 %v671, %v757
    %759 = vmatmul.bf16.gmra.mxu0 %v643
    %v760 = vpop.f32.mrf.mxu0
    %v761 = vadd.f32 %v671, %v760
    %v762 = vpop.f32.mrf.mxu0
    %v763 = vadd.f32 %v671, %v762
    %764 = vmatmul.bf16.gmra.mxu0 %v644
    %v765 = vpop.f32.mrf.mxu0
    %v766 = vadd.f32 %v671, %v765
    %v767 = vpop.f32.mrf.mxu0
    %v768 = vadd.f32 %v671, %v767
    %769 = vmatmul.bf16.gmra.mxu0 %v645
    %v770 = vpop.f32.mrf.mxu0
    %v771 = vadd.f32 %v671, %v770
    %v772 = vpop.f32.mrf.mxu0
    %v773 = vadd.f32 %v671, %v772
    %774 = vmatmul.bf16.gmra.mxu0 %v646
    %v775 = vpop.f32.mrf.mxu0
    %v776 = vadd.f32 %v671, %v775
    %v777 = vpop.f32.mrf.mxu0
    %v778 = vadd.f32 %v671, %v777
    %779 = vmatmul.bf16.gmra.mxu0 %v647
    %v780 = vpop.f32.mrf.mxu0
    %v781 = vadd.f32 %v671, %v780
    %v782 = vpop.f32.mrf.mxu0
    %v783 = vadd.f32 %v671, %v782
    %784 = vmatmul.bf16.gmra.mxu0 %v648
    %v785 = vpop.f32.mrf.mxu0
    %v786 = vadd.f32 %v671, %v785
    %v787 = vpop.f32.mrf.mxu0
    %v788 = vadd.f32 %v671, %v787
    %789 = vmatmul.bf16.gmra.mxu0 %v649
    %v790 = vpop.f32.mrf.mxu0
    %v791 = vadd.f32 %v671, %v790
    %v792 = vpop.f32.mrf.mxu0
    %v793 = vadd.f32 %v671, %v792
    %794 = vmatmul.bf16.gmra.mxu0 %v650
    %v795 = vpop.f32.mrf.mxu0
    %v796 = vadd.f32 %v671, %v795
    %v797 = vpop.f32.mrf.mxu0
    %v798 = vadd.f32 %v671, %v797
    %799 = vmatmul.bf16.gmra.mxu0 %v651
    %v800 = vpop.f32.mrf.mxu0
    %v801 = vadd.f32 %v671, %v800
    %v802 = vpop.f32.mrf.mxu0
    %v803 = vadd.f32 %v671, %v802
    %804 = vmatmul.bf16.gmra.mxu0 %v652
    %v805 = vpop.f32.mrf.mxu0
    %v806 = vadd.f32 %v671, %v805
    %v807 = vpop.f32.mrf.mxu0
    %v808 = vadd.f32 %v671, %v807
    %809 = vdwg.mxu0
    %v810 = vpack.c.bf16 %v731, %v731
    %v811 = vpack.c.bf16 %v733, %v733
    %v812 = vpack.c.bf16 %v736, %v736
    %v813 = vpack.c.bf16 %v738, %v738
    %v814 = vpack.c.bf16 %v741, %v741
    %v815 = vpack.c.bf16 %v743, %v743
    %v816 = vpack.c.bf16 %v746, %v746
    %v817 = vpack.c.bf16 %v748, %v748
    %v818 = vpack.c.bf16 %v751, %v751
    %v819 = vpack.c.bf16 %v753, %v753
    %v820 = vpack.c.bf16 %v756, %v756
    %v821 = vpack.c.bf16 %v758, %v758
    %v822 = vpack.c.bf16 %v761, %v761
    %v823 = vpack.c.bf16 %v763, %v763
    %v824 = vpack.c.bf16 %v766, %v766
    %v825 = vpack.c.bf16 %v768, %v768
    %v826 = vpack.c.bf16 %v771, %v771
    %v827 = vpack.c.bf16 %v773, %v773
    %v828 = vpack.c.bf16 %v776, %v776
    %v829 = vpack.c.bf16 %v778, %v778
    %v830 = vpack.c.bf16 %v781, %v781
    %v831 = vpack.c.bf16 %v783, %v783
    %v832 = vpack.c.bf16 %v786, %v786
    %v833 = vpack.c.bf16 %v788, %v788
    %v834 = vpack.c.bf16 %v791, %v791
    %v835 = vpack.c.bf16 %v793, %v793
    %v836 = vpack.c.bf16 %v796, %v796
    %v837 = vpack.c.bf16 %v798, %v798
    %v838 = vpack.c.bf16 %v801, %v801
    %v839 = vpack.c.bf16 %v803, %v803
    %v840 = vpack.c.bf16 %v806, %v806
    %v841 = vpack.c.bf16 %v808, %v808
    %v842 = vunpack.c.l.bf16 %v810
    %v843 = vunpack.c.l.bf16 %v811
    %v844 = vunpack.c.l.bf16 %v812
    %v845 = vunpack.c.l.bf16 %v813
    %v846 = vunpack.c.l.bf16 %v814
    %v847 = vunpack.c.l.bf16 %v815
    %v848 = vunpack.c.l.bf16 %v816
    %v849 = vunpack.c.l.bf16 %v817
    %v850 = vunpack.c.l.bf16 %v818
    %v851 = vunpack.c.l.bf16 %v819
    %v852 = vunpack.c.l.bf16 %v820
    %v853 = vunpack.c.l.bf16 %v821
    %v854 = vunpack.c.l.bf16 %v822
    %v855 = vunpack.c.l.bf16 %v823
    %v856 = vunpack.c.l.bf16 %v824
    %v857 = vunpack.c.l.bf16 %v825
    %v858 = vunpack.c.l.bf16 %v826
    %v859 = vunpack.c.l.bf16 %v827
    %v860 = vunpack.c.l.bf16 %v828
    %v861 = vunpack.c.l.bf16 %v829
    %v862 = vunpack.c.l.bf16 %v830
    %v863 = vunpack.c.l.bf16 %v831
    %v864 = vunpack.c.l.bf16 %v832
    %v865 = vunpack.c.l.bf16 %v833
    %v866 = vunpack.c.l.bf16 %v834
    %v867 = vunpack.c.l.bf16 %v835
    %v868 = vunpack.c.l.bf16 %v836
    %v869 = vunpack.c.l.bf16 %v837
    %v870 = vunpack.c.l.bf16 %v838
    %v871 = vunpack.c.l.bf16 %v839
    %v872 = vunpack.c.l.bf16 %v840
    %v873 = vunpack.c.l.bf16 %v841
    %vm874 = vcmp.gt.f32.partialorder %v842, 0.0
    %vm875 = vcmp.gt.f32.partialorder %v843, 0.0
    %vm876 = vcmp.gt.f32.partialorder %v844, 0.0
    %vm877 = vcmp.gt.f32.partialorder %v845, 0.0
    %vm878 = vcmp.gt.f32.partialorder %v846, 0.0
    %vm879 = vcmp.gt.f32.partialorder %v847, 0.0
    %vm880 = vcmp.gt.f32.partialorder %v848, 0.0
    %vm881 = vcmp.gt.f32.partialorder %v849, 0.0
    %vm882 = vcmp.gt.f32.partialorder %v850, 0.0
    %vm883 = vcmp.gt.f32.partialorder %v851, 0.0
    %vm884 = vcmp.gt.f32.partialorder %v852, 0.0
    %vm885 = vcmp.gt.f32.partialorder %v853, 0.0
    %vm886 = vcmp.gt.f32.partialorder %v854, 0.0
    %vm887 = vcmp.gt.f32.partialorder %v855, 0.0
    %vm888 = vcmp.gt.f32.partialorder %v856, 0.0
    %vm889 = vcmp.gt.f32.partialorder %v857, 0.0
    %vm890 = vcmp.gt.f32.partialorder %v858, 0.0
    %vm891 = vcmp.gt.f32.partialorder %v859, 0.0
    %vm892 = vcmp.gt.f32.partialorder %v860, 0.0
    %vm893 = vcmp.gt.f32.partialorder %v861, 0.0
    %vm894 = vcmp.gt.f32.partialorder %v862, 0.0
    %vm895 = vcmp.gt.f32.partialorder %v863, 0.0
    %vm896 = vcmp.gt.f32.partialorder %v864, 0.0
    %vm897 = vcmp.gt.f32.partialorder %v865, 0.0
    %vm898 = vcmp.gt.f32.partialorder %v866, 0.0
    %vm899 = vcmp.gt.f32.partialorder %v867, 0.0
    %vm900 = vcmp.gt.f32.partialorder %v868, 0.0
    %vm901 = vcmp.gt.f32.partialorder %v869, 0.0
    %vm902 = vcmp.gt.f32.partialorder %v870, 0.0
    %vm903 = vcmp.gt.f32.partialorder %v871, 0.0
    %vm904 = vcmp.gt.f32.partialorder %v872, 0.0
    %vm905 = vcmp.gt.f32.partialorder %v873, 0.0
    %v906 = vmul.f32 %v842, 0.20019531
    %v907 = vmul.f32 %v843, 0.20019531
    %v908 = vmul.f32 %v844, 0.20019531
    %v909 = vmul.f32 %v845, 0.20019531
    %v910 = vmul.f32 %v846, 0.20019531
    %v911 = vmul.f32 %v847, 0.20019531
    %v912 = vmul.f32 %v848, 0.20019531
    %v913 = vmul.f32 %v849, 0.20019531
    %v914 = vmul.f32 %v850, 0.20019531
    %v915 = vmul.f32 %v851, 0.20019531
    %v916 = vmul.f32 %v852, 0.20019531
    %v917 = vmul.f32 %v853, 0.20019531
    %v918 = vmul.f32 %v854, 0.20019531
    %v919 = vmul.f32 %v855, 0.20019531
    %v920 = vmul.f32 %v856, 0.20019531
    %v921 = vmul.f32 %v857, 0.20019531
    %v922 = vmul.f32 %v858, 0.20019531
    %v923 = vmul.f32 %v859, 0.20019531
    %v924 = vmul.f32 %v860, 0.20019531
    %v925 = vmul.f32 %v861, 0.20019531
    %v926 = vmul.f32 %v862, 0.20019531
    %v927 = vmul.f32 %v863, 0.20019531
    %v928 = vmul.f32 %v864, 0.20019531
    %v929 = vmul.f32 %v865, 0.20019531
    %v930 = vmul.f32 %v866, 0.20019531
    %v931 = vmul.f32 %v867, 0.20019531
    %v932 = vmul.f32 %v868, 0.20019531
    %v933 = vmul.f32 %v869, 0.20019531
    %v934 = vmul.f32 %v870, 0.20019531
    %v935 = vmul.f32 %v871, 0.20019531
    %v936 = vmul.f32 %v872, 0.20019531
    %v937 = vmul.f32 %v873, 0.20019531
    %v938 = vpack.c.bf16 %v906, %v906
    %v939 = vpack.c.bf16 %v907, %v907
    %v940 = vpack.c.bf16 %v908, %v908
    %v941 = vpack.c.bf16 %v909, %v909
    %v942 = vpack.c.bf16 %v910, %v910
    %v943 = vpack.c.bf16 %v911, %v911
    %v944 = vpack.c.bf16 %v912, %v912
    %v945 = vpack.c.bf16 %v913, %v913
    %v946 = vpack.c.bf16 %v914, %v914
    %v947 = vpack.c.bf16 %v915, %v915
    %v948 = vpack.c.bf16 %v916, %v916
    %v949 = vpack.c.bf16 %v917, %v917
    %v950 = vpack.c.bf16 %v918, %v918
    %v951 = vpack.c.bf16 %v919, %v919
    %v952 = vpack.c.bf16 %v920, %v920
    %v953 = vpack.c.bf16 %v921, %v921
    %v954 = vpack.c.bf16 %v922, %v922
    %v955 = vpack.c.bf16 %v923, %v923
    %v956 = vpack.c.bf16 %v924, %v924
    %v957 = vpack.c.bf16 %v925, %v925
    %v958 = vpack.c.bf16 %v926, %v926
    %v959 = vpack.c.bf16 %v927, %v927
    %v960 = vpack.c.bf16 %v928, %v928
    %v961 = vpack.c.bf16 %v929, %v929
    %v962 = vpack.c.bf16 %v930, %v930
    %v963 = vpack.c.bf16 %v931, %v931
    %v964 = vpack.c.bf16 %v932, %v932
    %v965 = vpack.c.bf16 %v933, %v933
    %v966 = vpack.c.bf16 %v934, %v934
    %v967 = vpack.c.bf16 %v935, %v935
    %v968 = vpack.c.bf16 %v936, %v936
    %v969 = vpack.c.bf16 %v937, %v937
    %vm970 = vmpackc.low %vm874, %vm874
    %vm971 = vmpackc.low %vm875, %vm875
    %vm972 = vmpackc.low %vm876, %vm876
    %vm973 = vmpackc.low %vm877, %vm877
    %vm974 = vmpackc.low %vm878, %vm878
    %vm975 = vmpackc.low %vm879, %vm879
    %vm976 = vmpackc.low %vm880, %vm880
    %vm977 = vmpackc.low %vm881, %vm881
    %vm978 = vmpackc.low %vm882, %vm882
    %vm979 = vmpackc.low %vm883, %vm883
    %vm980 = vmpackc.low %vm884, %vm884
    %vm981 = vmpackc.low %vm885, %vm885
    %vm982 = vmpackc.low %vm886, %vm886
    %vm983 = vmpackc.low %vm887, %vm887
    %vm984 = vmpackc.low %vm888, %vm888
    %vm985 = vmpackc.low %vm889, %vm889
    %vm986 = vmpackc.low %vm890, %vm890
    %vm987 = vmpackc.low %vm891, %vm891
    %vm988 = vmpackc.low %vm892, %vm892
    %vm989 = vmpackc.low %vm893, %vm893
    %vm990 = vmpackc.low %vm894, %vm894
    %vm991 = vmpackc.low %vm895, %vm895
    %vm992 = vmpackc.low %vm896, %vm896
    %vm993 = vmpackc.low %vm897, %vm897
    %vm994 = vmpackc.low %vm898, %vm898
    %vm995 = vmpackc.low %vm899, %vm899
    %vm996 = vmpackc.low %vm900, %vm900
    %vm997 = vmpackc.low %vm901, %vm901
    %vm998 = vmpackc.low %vm902, %vm902
    %vm999 = vmpackc.low %vm903, %vm903
    %vm1000 = vmpackc.low %vm904, %vm904
    %vm1001 = vmpackc.low %vm905, %vm905
    %v1002 = vsel %vm970, %v810, %v938
    %v1003 = vsel %vm971, %v811, %v939
    %v1004 = vsel %vm972, %v812, %v940
    %v1005 = vsel %vm973, %v813, %v941
    %v1006 = vsel %vm974, %v814, %v942
    %v1007 = vsel %vm975, %v815, %v943
    %v1008 = vsel %vm976, %v816, %v944
    %v1009 = vsel %vm977, %v817, %v945
    %v1010 = vsel %vm978, %v818, %v946
    %v1011 = vsel %vm979, %v819, %v947
    %v1012 = vsel %vm980, %v820, %v948
    %v1013 = vsel %vm981, %v821, %v949
    %v1014 = vsel %vm982, %v822, %v950
    %v1015 = vsel %vm983, %v823, %v951
    %v1016 = vsel %vm984, %v824, %v952
    %v1017 = vsel %vm985, %v825, %v953
    %v1018 = vsel %vm986, %v826, %v954
    %v1019 = vsel %vm987, %v827, %v955
    %v1020 = vsel %vm988, %v828, %v956
    %v1021 = vsel %vm989, %v829, %v957
    %v1022 = vsel %vm990, %v830, %v958
    %v1023 = vsel %vm991, %v831, %v959
    %v1024 = vsel %vm992, %v832, %v960
    %v1025 = vsel %vm993, %v833, %v961
    %v1026 = vsel %vm994, %v834, %v962
    %v1027 = vsel %vm995, %v835, %v963
    %v1028 = vsel %vm996, %v836, %v964
    %v1029 = vsel %vm997, %v837, %v965
    %v1030 = vsel %vm998, %v838, %v966
    %v1031 = vsel %vm999, %v839, %v967
    %v1032 = vsel %vm1000, %v840, %v968
    %v1033 = vsel %vm1001, %v841, %v969
    %v1034 = vld [vmem:[%s7] sm:$0x1]
    %s1035 = sld [smem:[#allocation2]]
    %v1036 = vstv %s1035
    %v1069 = vunpack.c.l.b16 %v1002
    %v1070 = vunpack.c.l.b16 %v1003
    %v1071 = vunpack.c.l.b16 %v1004
    %v1072 = vunpack.c.l.b16 %v1005
    %v1073 = vunpack.c.l.b16 %v1006
    %v1074 = vunpack.c.l.b16 %v1007
    %v1075 = vunpack.c.l.b16 %v1008
    %v1076 = vunpack.c.l.b16 %v1009
    %v1077 = vunpack.c.l.b16 %v1010
    %v1078 = vunpack.c.l.b16 %v1011
    %v1079 = vunpack.c.l.b16 %v1012
    %v1080 = vunpack.c.l.b16 %v1013
    %v1081 = vunpack.c.l.b16 %v1014
    %v1082 = vunpack.c.l.b16 %v1015
    %v1083 = vunpack.c.l.b16 %v1016
    %v1084 = vunpack.c.l.b16 %v1017
    %v1085 = vunpack.c.l.b16 %v1018
    %v1086 = vunpack.c.l.b16 %v1019
    %v1087 = vunpack.c.l.b16 %v1020
    %v1088 = vunpack.c.l.b16 %v1021
    %v1089 = vunpack.c.l.b16 %v1022
    %v1090 = vunpack.c.l.b16 %v1023
    %v1091 = vunpack.c.l.b16 %v1024
    %v1092 = vunpack.c.l.b16 %v1025
    %v1093 = vunpack.c.l.b16 %v1026
    %v1094 = vunpack.c.l.b16 %v1027
    %v1095 = vunpack.c.l.b16 %v1028
    %v1096 = vunpack.c.l.b16 %v1029
    %v1097 = vunpack.c.l.b16 %v1030
    %v1098 = vunpack.c.l.b16 %v1031
    %v1099 = vunpack.c.l.b16 %v1032
    %v1100 = vunpack.c.l.b16 %v1033
    %v1101 = vpack.c.b16 %v1070, %v1069
    %v1102 = vpack.c.b16 %v1072, %v1071
    %v1103 = vpack.c.b16 %v1074, %v1073
    %v1104 = vpack.c.b16 %v1076, %v1075
    %v1105 = vpack.c.b16 %v1078, %v1077
    %v1106 = vpack.c.b16 %v1080, %v1079
    %v1107 = vpack.c.b16 %v1082, %v1081
    %v1108 = vpack.c.b16 %v1084, %v1083
    %v1109 = vpack.c.b16 %v1086, %v1085
    %v1110 = vpack.c.b16 %v1088, %v1087
    %v1111 = vpack.c.b16 %v1090, %v1089
    %v1112 = vpack.c.b16 %v1092, %v1091
    %v1113 = vpack.c.b16 %v1094, %v1093
    %v1114 = vpack.c.b16 %v1096, %v1095
    %v1115 = vpack.c.b16 %v1098, %v1097
    %v1116 = vpack.c.b16 %v1100, %v1099
    %1133 = vmatpush.bf16.xpose.msra.mxu0 %v1108
    %1134 = vmatpush.bf16.xpose.msra.mxu0 %v1107
    %1135 = vmatpush.bf16.xpose.msra.mxu0 %v1106
    %1136 = vmatpush.bf16.xpose.msra.mxu0 %v1105
    %1137 = vmatpush.bf16.xpose.msra.mxu0 %v1104
    %1138 = vmatpush.bf16.xpose.msra.mxu0 %v1103
    %1139 = vmatpush.bf16.xpose.msra.mxu0 %v1102
    %1140 = vmatpush.bf16.xpose.msra.mxu0 %v1101
    %1141 = vmatmul.bf16.gmra.mxu0 %v1034
    %v1142 = vpop.f32.mrf.mxu0
    %v1143 = vadd.f32 %v1036, %v1142
    %v1144 = vpop.f32.mrf.mxu0
    %1145 = vdwg.mxu0
    %1146 = vmatpush.bf16.xpose.msra.mxu0 %v1116
    %1147 = vmatpush.bf16.xpose.msra.mxu0 %v1115
    %1148 = vmatpush.bf16.xpose.msra.mxu0 %v1114
    %1149 = vmatpush.bf16.xpose.msra.mxu0 %v1113
    %1150 = vmatpush.bf16.xpose.msra.mxu0 %v1112
    %1151 = vmatpush.bf16.xpose.msra.mxu0 %v1111
    %1152 = vmatpush.bf16.xpose.msra.mxu0 %v1110
    %1153 = vmatpush.bf16.xpose.msra.mxu0 %v1109
    %1154 = vmatmul.bf16.gmra.mxu0 %v1034
    %v1155 = vpop.f32.mrf.mxu0
    %v1156 = vadd.f32 %v1036, %v1155
    %v1157 = vpop.f32.mrf.mxu0
    %1158 = vdwg.mxu0
    %v1159 = vsub.f32 0.0, %v1143
    %v1160 = vsub.f32 0.0, %v1156
    %v1161 = vmul.f32 %v1159, 1.442695
    %v1162 = vpow.pop %v1161
    %v1163 = vmul.f32 %v1160, 1.442695
    %v1164 = vpow.pop %v1163
    %v1165 = vadd.f32 %v1162, 1.0
    %v1166 = vadd.f32 %v1164, 1.0
    %v1167 = vrcp.pop %v1165
    %v1168 = vmul.f32 %v1165, %v1167
    %v1169 = vsub.f32 1.0, %v1168
    %v1170 = vmul.f32 %v1167, %v1169
    %v1171 = vadd.f32 %v1167, %v1170
    %vm1172 = vweird.f32 %v1165
    %vm1173 = vweird.f32 %v1167
    %vm1174 = vmor %vm1172, %vm1173
    %v1175 = vsel %vm1174, %v1167, %v1171
    %v1176 = vand.u32 2147483647, %v1165
    %vm1177 = vcmp.eq.f32.partialorder %v1176, 8.507059e+37
    %v1178 = vand.u32 %v1165, 2147483648
    %v1179 = vor.u32 1.1754944e-38, %v1178
    %v1180 = vsel %vm1177, %v1179, %v1175
    %v1181 = vmul.f32 1.0, %v1180
    %v1182 = vrcp.pop %v1166
    %v1183 = vmul.f32 %v1166, %v1182
    %v1184 = vsub.f32 1.0, %v1183
    %v1185 = vmul.f32 %v1182, %v1184
    %v1186 = vadd.f32 %v1182, %v1185
    %vm1187 = vweird.f32 %v1166
    %vm1188 = vweird.f32 %v1182
    %vm1189 = vmor %vm1187, %vm1188
    %v1190 = vsel %vm1189, %v1182, %v1186
    %v1191 = vand.u32 2147483647, %v1166
    %vm1192 = vcmp.eq.f32.partialorder %v1191, 8.507059e+37
    %v1193 = vand.u32 %v1166, 2147483648
    %v1194 = vor.u32 1.1754944e-38, %v1193
    %v1195 = vsel %vm1192, %v1194, %v1190
    %v1196 = vmul.f32 1.0, %v1195
    %v1199 = vrot.slane %v1196, 7
    %vm1200 = vcmask 1040384
    %v1201 = vsel %vm1200, %v1181, %v1199
    %v1203 = vlaneseq
    %vm1204 = vcmp.ge.s32.totalorder %v1203, 0
    %vm1205 = vcmp.lt.s32.totalorder %v1203, 256
    %vm1206 = vmand %vm1204, %vm1205
    %1207 = vst.msk [vmem:[#allocation11] sm:$0x3] %vm1206, %v1201
    // Predicated region
    $region54: #{tpu_custom_call.1} parent=1 // pred_check
      _
    $region55: #{tpu_custom_call.1} parent=1 // pred_check_branch
      %1209 = sbr.rel (0) target = $region57
    $region56: #{tpu_custom_call.1} parent=1 // pred_region
      %1211 = vsyncadd [#allocation5], 0
      %s1213 = sshll.u32 [#allocation11], 4
      %s1214 = int_to_ptr.vmem [resolvable:$true] %s1213
      %s1215 = sshll.u32 %s9, 4
      %s1216 = int_to_ptr.hbm [resolvable:$true] %s1215
      %1218 = dma.vmem_to_hbm [thread:$0]  %s1214, 32, %s1216, [#allocation5]
    $region57: #{tpu_custom_call.1} parent=1 // pred_fallthru
      _
    // Predicated region
    $region58: #{tpu_custom_call.1} parent=1 // pred_check
      _
    $region59: #{tpu_custom_call.1} parent=1 // pred_check_branch
      %1220 = sbr.rel (0) target = $region61
    $region60: #{tpu_custom_call.1} parent=1 // pred_region
      %1222 = dma.done [#allocation5], 32
    $region61: #{tpu_custom_call.1} parent=1 // pred_fallthru
      _
    %1223 = vsyncpa [#allocation4], 1
    %1224 = vsyncpa [#allocation7], 1
    %1225 = vsyncpa [#allocation10], 1
    %1226 = vsyncpa [#allocation5], 1

</llo_original>
